<compile_context>
chip_gen: v7x
topology: tpu7x:2x2x1
jax: 0.10.0
libtpu: 0.0.40
codegen_flags: <defaults>
</compile_context>

<pallas_src>
import functools

import jax
import jax.numpy as jnp
from jax import lax
from jax.experimental import pallas as pl
from jax.experimental.pallas import tpu as pltpu

# Plain Python floats -> jaxpr literals (NOT captured jax.Array constants).
_POS_INF = 3.0e38
_NEG_INF = -3.0e38
_INF_GUARD = 1.0e38


def _nca_kernel(xb_ref, xf_ref, tcol_ref, trow_ref, out_ref,
                *, alpha, k, n, tm, use_bf16_matmul):
    xb = xb_ref[...]        # (TM, d) f32  : this block's query rows
    xf = xf_ref[...]        # (n,  d) f32  : all rows (RHS, resident across steps)
    tcol = tcol_ref[...]    # (TM, 1) i32
    trow = trow_ref[...]    # (1,  n) i32

    # sim block on the MXU; contract the feature dim of both operands directly.
    dnums = (((1,), (1,)), ((), ()))
    if use_bf16_matmul:
        sim = lax.dot_general(xb.astype(jnp.bfloat16), xf.astype(jnp.bfloat16),
                              dnums, preferred_element_type=jnp.float32)
    else:
        sim = lax.dot_general(xb, xf, dnums,
                              preferred_element_type=jnp.float32)   # (TM, n)

    same = (tcol == trow)                              # (TM, n) label equality
    pos_mask = jnp.logical_and(same, sim < 1.0)        # pos_pair_ (filtered < 1)
    neg_mask = jnp.logical_not(same)                   # neg_pair_
    pair_mask = jnp.logical_or(pos_mask, neg_mask)

    # base = mean of the full row of sim (matches torch.mean(sim_mat[i]))
    base = jnp.sum(sim, axis=1, keepdims=True) * (1.0 / n)           # (TM, 1)

    # ---- K-th order statistic (sorted(pair)[K]) per row -------------------
    # Iterative min-extraction: each pass removes the current row minimum
    # (with all its ties); once the cumulative removed count exceeds k, that
    # minimum is exactly sorted(pair)[k]. At most k+1 passes.
    remaining = jnp.where(pair_mask, sim, _POS_INF)                   # (TM, n)
    thr0 = jnp.full((tm, 1), _NEG_INF, jnp.float32)
    cum0 = jnp.zeros((tm, 1), jnp.int32)
    done0 = jnp.zeros((tm, 1), jnp.bool_)

    def _body(_, carry):
        remaining, thr, cum, done = carry
        m = jnp.min(remaining, axis=1, keepdims=True)                 # (TM, 1)
        is_min = (remaining == m)
        cnt = jnp.sum(is_min.astype(jnp.int32), axis=1, keepdims=True)
        newly = jnp.logical_and(
            jnp.logical_not(done),
            jnp.logical_and((cum + cnt) > k, m < _INF_GUARD))
        thr = jnp.where(newly, m, thr)
        done = jnp.logical_or(done, newly)
        cum = cum + cnt
        remaining = jnp.where(is_min, _POS_INF, remaining)
        return remaining, thr, cum, done

    # Full unroll for small k (LLO visibility); bounded partial unroll otherwise
    # so large k does not explode code size.
    unroll = True if (k + 1) <= 8 else 8
    _, thr, _, _ = lax.fori_loop(0, k + 1, _body,
                                 (remaining, thr0, cum0, done0), unroll=unroll)

    pos_neig = jnp.logical_and(pos_mask, sim < thr)
    neg_neig = jnp.logical_and(neg_mask, sim < thr)

    exp_term = jnp.exp(alpha * (base - sim))                          # (TM, n) EUP

    pos_f = pos_neig.astype(jnp.float32)
    neg_f = neg_neig.astype(jnp.float32)
    pos_logit = jnp.sum(exp_term * pos_f, axis=1, keepdims=True)      # (TM, 1)
    neg_logit = jnp.sum(exp_term * neg_f, axis=1, keepdims=True)

    # fallback: no pos neighbor below threshold -> use pos_pair[0] (min pos sim)
    pos_count = jnp.sum(pos_f, axis=1, keepdims=True)
    min_pos = jnp.min(jnp.where(pos_mask, sim, _POS_INF), axis=1, keepdims=True)
    pos_logit_fb = jnp.exp(alpha * (base - min_pos))
    pos_logit = jnp.where(pos_count < 0.5, pos_logit_fb, pos_logit)

    loss_rows = -jnp.log(pos_logit / (pos_logit + neg_logit))         # (TM, 1)

    # ---- per-row pos/neg mean sims (only the global last row is consumed) --
    # Computed for every row of the block (cheap vs. the matmul) so every grid
    # step is identical and the row axis stays safely "parallel".
    pos_all = pos_mask.astype(jnp.float32)
    neg_all = neg_mask.astype(jnp.float32)
    pos_cnt = jnp.sum(pos_all, axis=1, keepdims=True)
    neg_cnt = jnp.sum(neg_all, axis=1, keepdims=True)
    # Straight division matches torch.mean semantics (NaN if the set is empty).
    row_mps = jnp.sum(sim * pos_all, axis=1, keepdims=True) / pos_cnt
    row_mns = jnp.sum(sim * neg_all, axis=1, keepdims=True) / neg_cnt

    # Pack results into one lane-dense (TM, 128) block:
    #   lane 0 = per-row loss, lane 1 = row mean pos sim, lane 2 = row mean neg sim
    lane = lax.broadcasted_iota(jnp.int32, (tm, 128), 1)
    out = jnp.where(lane == 0, loss_rows, 0.0)
    out = out + jnp.where(lane == 1, row_mps, 0.0)
    out = out + jnp.where(lane == 2, row_mns, 0.0)
    out_ref[...] = out


def nca_loss(inputs, targets, *, alpha=16.0, k=32, block_rows=None,
             use_bf16_matmul=False):
    """inputs: (n, d) f32 embeddings; targets: (n,) int labels."""
    n, d = inputs.shape
    x = inputs.astype(jnp.float32)
    tcol = targets.astype(jnp.int32).reshape(n, 1)
    trow = targets.astype(jnp.int32).reshape(1, n)

    if block_rows is None:
        tm = n if n <= 128 else 128
    else:
        tm = int(block_rows)
    if n % tm != 0:
        raise ValueError(f"n={n} must be divisible by block_rows={tm}")
    if tm != n and tm % 8 != 0:
        raise ValueError("block_rows must be a multiple of 8 (or equal to n)")
    num_blocks = n // tm

    kernel = functools.partial(
        _nca_kernel, alpha=float(alpha), k=int(k), n=int(n), tm=int(tm),
        use_bf16_matmul=bool(use_bf16_matmul))

    per_row = pl.pallas_call(
        kernel,
        out_shape=jax.ShapeDtypeStruct((n, 128), jnp.float32),
        grid=(num_blocks,),
        in_specs=[
            pl.BlockSpec((tm, d), lambda i: (i, 0)),   # query row block
            pl.BlockSpec((n, d), lambda i: (0, 0)),    # full x (RHS, resident)
            pl.BlockSpec((tm, 1), lambda i: (i, 0)),   # labels for block rows
            pl.BlockSpec((1, n), lambda i: (0, 0)),    # all labels (row vector)
        ],
        out_specs=pl.BlockSpec((tm, 128), lambda i: (i, 0)),
        compiler_params=pltpu.CompilerParams(
            dimension_semantics=("parallel",),         # rows independent -> megacore on v7x
            vmem_limit_bytes=48 * 1024 * 1024),        # fits v7x 64 MiB, > default elsewhere
    )(x, x, tcol, trow)

    loss = jnp.mean(per_row[:, 0])          # mean over rows (tiny host-side glue)
    prec = jnp.float32(0.0)                 # `c` is never incremented in the reference
    mean_pos_sim = per_row[n - 1, 1]
    mean_neg_sim = per_row[n - 1, 2]
    return loss, prec, mean_pos_sim, mean_neg_sim


if __name__ == "__main__":
    key = jax.random.PRNGKey(0)
    n, d = 8, 32                                  # small batch, small embedding dim
    x = jax.random.normal(key, (n, d), dtype=jnp.float32)
    # L2-normalize embeddings (typical metric-learning input; keeps sims in [-1, 1])
    x = x / jnp.linalg.norm(x, axis=1, keepdims=True)
    targets = jnp.array([0, 0, 1, 1, 2, 2, 3, 3], dtype=jnp.int32)

    # k=4 < |pair set| (~7) so sorted(pair)[k] is in range for this small batch
    loss, prec, mean_pos_sim, mean_neg_sim = nca_loss(x, targets, alpha=16.0, k=4)
    jax.block_until_ready((loss, prec, mean_pos_sim, mean_neg_sim))
    print("KERNEL_OK")
</pallas_src>

<mosaic_0001>
module attributes {stable_mosaic.version = 11 : i64} {
  func.func @_nca_kernel(%arg0: i32, %arg1: memref<8x32xf32, #tpu.memory_space<vmem>>, %arg2: memref<8x32xf32, #tpu.memory_space<vmem>>, %arg3: memref<8x1xi32, #tpu.memory_space<vmem>>, %arg4: memref<1x8xi32, #tpu.memory_space<vmem>>, %arg5: memref<8x128xf32, #tpu.memory_space<vmem>>) attributes {dimension_semantics = [#tpu.dimension_semantics<parallel>], iteration_bounds = array<i64: 1>, scalar_prefetch = 0 : i64, scratch_operands = 0 : i64, tpu.core_type = #tpu.core_type<tc>, window_params = [{transform_indices = @transform_0, window_bounds = array<i64: 8, 32>}, {pipeline_mode = #tpu.pipeline_mode<synchronous>, transform_indices = @transform_1, window_bounds = array<i64: 8, 32>}, {transform_indices = @transform_2, window_bounds = array<i64: 8, 1>}, {pipeline_mode = #tpu.pipeline_mode<synchronous>, transform_indices = @transform_3, window_bounds = array<i64: 1, 8>}, {transform_indices = @transform_4, window_bounds = array<i64: 8, 128>}]} {
    %c0 = arith.constant 0 : index
    %c0_0 = arith.constant 0 : index
    %0 = vector.load %arg1[%c0, %c0_0] : memref<8x32xf32, #tpu.memory_space<vmem>>, vector<8x32xf32>
    %c0_1 = arith.constant 0 : index
    %c0_2 = arith.constant 0 : index
    %1 = vector.load %arg2[%c0_1, %c0_2] : memref<8x32xf32, #tpu.memory_space<vmem>>, vector<8x32xf32>
    %c0_3 = arith.constant 0 : index
    %c0_4 = arith.constant 0 : index
    %2 = vector.load %arg3[%c0_3, %c0_4] : memref<8x1xi32, #tpu.memory_space<vmem>>, vector<8x1xi32>
    %c0_5 = arith.constant 0 : index
    %c0_6 = arith.constant 0 : index
    %3 = vector.load %arg4[%c0_5, %c0_6] : memref<1x8xi32, #tpu.memory_space<vmem>>, vector<1x8xi32>
    %cst = arith.constant dense<0.000000e+00> : vector<8x8xf32>
    %4 = tpu.matmul %0, %1, %cst {dimension_numbers = #tpu.dot_dimension_numbers<[1], [1], [0], [0], [0, 0, 1, 0], [], []>} : vector<8x32xf32>, vector<8x32xf32>, vector<8x8xf32> -> vector<8x8xf32>
    %5 = vector.broadcast %2 : vector<8x1xi32> to vector<8x8xi32>
    %6 = vector.broadcast %3 : vector<1x8xi32> to vector<8x8xi32>
    %7 = arith.cmpi eq, %5, %6 : vector<8x8xi32>
    %cst_7 = arith.constant 1.000000e+00 : f32
    %8 = vector.broadcast %cst_7 : f32 to vector<8x8xf32>
    %9 = arith.cmpf olt, %4, %8 : vector<8x8xf32>
    %10 = arith.andi %7, %9 : vector<8x8xi1>
    %cst_8 = arith.constant dense<true> : vector<8x8xi1>
    %11 = arith.xori %7, %cst_8 : vector<8x8xi1>
    %12 = arith.ori %10, %11 : vector<8x8xi1>
    %cst_9 = arith.constant dense<0.000000e+00> : vector<8xf32>
    %13 = vector.multi_reduction <add>, %4, %cst_9 [1] : vector<8x8xf32> to vector<8xf32>
    %14 = vector.shape_cast %13 : vector<8xf32> to vector<8x1xf32>
    %cst_10 = arith.constant 1.250000e-01 : f32
    %15 = vector.broadcast %cst_10 : f32 to vector<8x1xf32>
    %16 = arith.mulf %14, %15 : vector<8x1xf32>
    %cst_11 = arith.constant 3.000000e+38 : f32
    %17 = vector.broadcast %cst_11 : f32 to vector<8x8xf32>
    %18 = arith.select %12, %4, %17 : vector<8x8xi1>, vector<8x8xf32>
    %cst_12 = arith.constant -3.000000e+38 : f32
    %19 = vector.broadcast %cst_12 : f32 to vector<8x1xf32>
    %c0_i32 = arith.constant 0 : i32
    %20 = vector.broadcast %c0_i32 : i32 to vector<8x1xi32>
    %false = arith.constant false
    %21 = vector.broadcast %false : i1 to vector<8x1xi1>
    %c0_i32_13 = arith.constant 0 : i32
    %cst_14 = arith.constant dense<0x7F800000> : vector<8xf32>
    %22 = vector.multi_reduction <minimumf>, %18, %cst_14 [1] : vector<8x8xf32> to vector<8xf32>
    %23 = vector.shape_cast %22 : vector<8xf32> to vector<8x1xf32>
    %24 = vector.broadcast %23 : vector<8x1xf32> to vector<8x8xf32>
    %25 = arith.cmpf oeq, %18, %24 : vector<8x8xf32>
    %26 = arith.extui %25 : vector<8x8xi1> to vector<8x8xi32>
    %cst_15 = arith.constant dense<0> : vector<8xi32>
    %27 = vector.multi_reduction <add>, %26, %cst_15 [1] : vector<8x8xi32> to vector<8xi32>
    %28 = vector.shape_cast %27 : vector<8xi32> to vector<8x1xi32>
    %cst_16 = arith.constant dense<true> : vector<8x1xi1>
    %29 = arith.xori %21, %cst_16 : vector<8x1xi1>
    %30 = arith.addi %20, %28 : vector<8x1xi32>
    %c4_i32 = arith.constant 4 : i32
    %31 = vector.broadcast %c4_i32 : i32 to vector<8x1xi32>
    %32 = arith.cmpi sgt, %30, %31 : vector<8x1xi32>
    %cst_17 = arith.constant 9.99999968E+37 : f32
    %33 = vector.broadcast %cst_17 : f32 to vector<8x1xf32>
    %34 = arith.cmpf olt, %23, %33 : vector<8x1xf32>
    %35 = arith.andi %32, %34 : vector<8x1xi1>
    %36 = arith.andi %29, %35 : vector<8x1xi1>
    %37 = arith.select %36, %23, %19 : vector<8x1xi1>, vector<8x1xf32>
    %38 = arith.ori %21, %36 : vector<8x1xi1>
    %39 = arith.addi %20, %28 : vector<8x1xi32>
    %cst_18 = arith.constant 3.000000e+38 : f32
    %40 = vector.broadcast %cst_18 : f32 to vector<8x8xf32>
    %41 = arith.select %25, %40, %18 : vector<8x8xi1>, vector<8x8xf32>
    %c1_i32 = arith.constant 1 : i32
    %cst_19 = arith.constant dense<0x7F800000> : vector<8xf32>
    %42 = vector.multi_reduction <minimumf>, %41, %cst_19 [1] : vector<8x8xf32> to vector<8xf32>
    %43 = vector.shape_cast %42 : vector<8xf32> to vector<8x1xf32>
    %44 = vector.broadcast %43 : vector<8x1xf32> to vector<8x8xf32>
    %45 = arith.cmpf oeq, %41, %44 : vector<8x8xf32>
    %46 = arith.extui %45 : vector<8x8xi1> to vector<8x8xi32>
    %cst_20 = arith.constant dense<0> : vector<8xi32>
    %47 = vector.multi_reduction <add>, %46, %cst_20 [1] : vector<8x8xi32> to vector<8xi32>
    %48 = vector.shape_cast %47 : vector<8xi32> to vector<8x1xi32>
    %cst_21 = arith.constant dense<true> : vector<8x1xi1>
    %49 = arith.xori %38, %cst_21 : vector<8x1xi1>
    %50 = arith.addi %39, %48 : vector<8x1xi32>
    %c4_i32_22 = arith.constant 4 : i32
    %51 = vector.broadcast %c4_i32_22 : i32 to vector<8x1xi32>
    %52 = arith.cmpi sgt, %50, %51 : vector<8x1xi32>
    %cst_23 = arith.constant 9.99999968E+37 : f32
    %53 = vector.broadcast %cst_23 : f32 to vector<8x1xf32>
    %54 = arith.cmpf olt, %43, %53 : vector<8x1xf32>
    %55 = arith.andi %52, %54 : vector<8x1xi1>
    %56 = arith.andi %49, %55 : vector<8x1xi1>
    %57 = arith.select %56, %43, %37 : vector<8x1xi1>, vector<8x1xf32>
    %58 = arith.ori %38, %56 : vector<8x1xi1>
    %59 = arith.addi %39, %48 : vector<8x1xi32>
    %cst_24 = arith.constant 3.000000e+38 : f32
    %60 = vector.broadcast %cst_24 : f32 to vector<8x8xf32>
    %61 = arith.select %45, %60, %41 : vector<8x8xi1>, vector<8x8xf32>
    %c2_i32 = arith.constant 2 : i32
    %cst_25 = arith.constant dense<0x7F800000> : vector<8xf32>
    %62 = vector.multi_reduction <minimumf>, %61, %cst_25 [1] : vector<8x8xf32> to vector<8xf32>
    %63 = vector.shape_cast %62 : vector<8xf32> to vector<8x1xf32>
    %64 = vector.broadcast %63 : vector<8x1xf32> to vector<8x8xf32>
    %65 = arith.cmpf oeq, %61, %64 : vector<8x8xf32>
    %66 = arith.extui %65 : vector<8x8xi1> to vector<8x8xi32>
    %cst_26 = arith.constant dense<0> : vector<8xi32>
    %67 = vector.multi_reduction <add>, %66, %cst_26 [1] : vector<8x8xi32> to vector<8xi32>
    %68 = vector.shape_cast %67 : vector<8xi32> to vector<8x1xi32>
    %cst_27 = arith.constant dense<true> : vector<8x1xi1>
    %69 = arith.xori %58, %cst_27 : vector<8x1xi1>
    %70 = arith.addi %59, %68 : vector<8x1xi32>
    %c4_i32_28 = arith.constant 4 : i32
    %71 = vector.broadcast %c4_i32_28 : i32 to vector<8x1xi32>
    %72 = arith.cmpi sgt, %70, %71 : vector<8x1xi32>
    %cst_29 = arith.constant 9.99999968E+37 : f32
    %73 = vector.broadcast %cst_29 : f32 to vector<8x1xf32>
    %74 = arith.cmpf olt, %63, %73 : vector<8x1xf32>
    %75 = arith.andi %72, %74 : vector<8x1xi1>
    %76 = arith.andi %69, %75 : vector<8x1xi1>
    %77 = arith.select %76, %63, %57 : vector<8x1xi1>, vector<8x1xf32>
    %78 = arith.ori %58, %76 : vector<8x1xi1>
    %79 = arith.addi %59, %68 : vector<8x1xi32>
    %cst_30 = arith.constant 3.000000e+38 : f32
    %80 = vector.broadcast %cst_30 : f32 to vector<8x8xf32>
    %81 = arith.select %65, %80, %61 : vector<8x8xi1>, vector<8x8xf32>
    %c3_i32 = arith.constant 3 : i32
    %cst_31 = arith.constant dense<0x7F800000> : vector<8xf32>
    %82 = vector.multi_reduction <minimumf>, %81, %cst_31 [1] : vector<8x8xf32> to vector<8xf32>
    %83 = vector.shape_cast %82 : vector<8xf32> to vector<8x1xf32>
    %84 = vector.broadcast %83 : vector<8x1xf32> to vector<8x8xf32>
    %85 = arith.cmpf oeq, %81, %84 : vector<8x8xf32>
    %86 = arith.extui %85 : vector<8x8xi1> to vector<8x8xi32>
    %cst_32 = arith.constant dense<0> : vector<8xi32>
    %87 = vector.multi_reduction <add>, %86, %cst_32 [1] : vector<8x8xi32> to vector<8xi32>
    %88 = vector.shape_cast %87 : vector<8xi32> to vector<8x1xi32>
    %cst_33 = arith.constant dense<true> : vector<8x1xi1>
    %89 = arith.xori %78, %cst_33 : vector<8x1xi1>
    %90 = arith.addi %79, %88 : vector<8x1xi32>
    %c4_i32_34 = arith.constant 4 : i32
    %91 = vector.broadcast %c4_i32_34 : i32 to vector<8x1xi32>
    %92 = arith.cmpi sgt, %90, %91 : vector<8x1xi32>
    %cst_35 = arith.constant 9.99999968E+37 : f32
    %93 = vector.broadcast %cst_35 : f32 to vector<8x1xf32>
    %94 = arith.cmpf olt, %83, %93 : vector<8x1xf32>
    %95 = arith.andi %92, %94 : vector<8x1xi1>
    %96 = arith.andi %89, %95 : vector<8x1xi1>
    %97 = arith.select %96, %83, %77 : vector<8x1xi1>, vector<8x1xf32>
    %98 = arith.ori %78, %96 : vector<8x1xi1>
    %99 = arith.addi %79, %88 : vector<8x1xi32>
    %cst_36 = arith.constant 3.000000e+38 : f32
    %100 = vector.broadcast %cst_36 : f32 to vector<8x8xf32>
    %101 = arith.select %85, %100, %81 : vector<8x8xi1>, vector<8x8xf32>
    %c4_i32_37 = arith.constant 4 : i32
    %cst_38 = arith.constant dense<0x7F800000> : vector<8xf32>
    %102 = vector.multi_reduction <minimumf>, %101, %cst_38 [1] : vector<8x8xf32> to vector<8xf32>
    %103 = vector.shape_cast %102 : vector<8xf32> to vector<8x1xf32>
    %104 = vector.broadcast %103 : vector<8x1xf32> to vector<8x8xf32>
    %105 = arith.cmpf oeq, %101, %104 : vector<8x8xf32>
    %106 = arith.extui %105 : vector<8x8xi1> to vector<8x8xi32>
    %cst_39 = arith.constant dense<0> : vector<8xi32>
    %107 = vector.multi_reduction <add>, %106, %cst_39 [1] : vector<8x8xi32> to vector<8xi32>
    %108 = vector.shape_cast %107 : vector<8xi32> to vector<8x1xi32>
    %cst_40 = arith.constant dense<true> : vector<8x1xi1>
    %109 = arith.xori %98, %cst_40 : vector<8x1xi1>
    %110 = arith.addi %99, %108 : vector<8x1xi32>
    %c4_i32_41 = arith.constant 4 : i32
    %111 = vector.broadcast %c4_i32_41 : i32 to vector<8x1xi32>
    %112 = arith.cmpi sgt, %110, %111 : vector<8x1xi32>
    %cst_42 = arith.constant 9.99999968E+37 : f32
    %113 = vector.broadcast %cst_42 : f32 to vector<8x1xf32>
    %114 = arith.cmpf olt, %103, %113 : vector<8x1xf32>
    %115 = arith.andi %112, %114 : vector<8x1xi1>
    %116 = arith.andi %109, %115 : vector<8x1xi1>
    %117 = arith.select %116, %103, %97 : vector<8x1xi1>, vector<8x1xf32>
    %118 = arith.ori %98, %116 : vector<8x1xi1>
    %119 = arith.addi %99, %108 : vector<8x1xi32>
    %cst_43 = arith.constant 3.000000e+38 : f32
    %120 = vector.broadcast %cst_43 : f32 to vector<8x8xf32>
    %121 = arith.select %105, %120, %101 : vector<8x8xi1>, vector<8x8xf32>
    %122 = vector.broadcast %117 : vector<8x1xf32> to vector<8x8xf32>
    %123 = arith.cmpf olt, %4, %122 : vector<8x8xf32>
    %124 = arith.andi %10, %123 : vector<8x8xi1>
    %125 = vector.broadcast %117 : vector<8x1xf32> to vector<8x8xf32>
    %126 = arith.cmpf olt, %4, %125 : vector<8x8xf32>
    %127 = arith.andi %11, %126 : vector<8x8xi1>
    %128 = vector.broadcast %16 : vector<8x1xf32> to vector<8x8xf32>
    %129 = arith.subf %128, %4 : vector<8x8xf32>
    %cst_44 = arith.constant 1.600000e+01 : f32
    %130 = vector.broadcast %cst_44 : f32 to vector<8x8xf32>
    %131 = arith.mulf %130, %129 : vector<8x8xf32>
    %132 = math.exp %131 : vector<8x8xf32>
    %133 = arith.extui %124 : vector<8x8xi1> to vector<8x8xi32>
    %134 = arith.sitofp %133 : vector<8x8xi32> to vector<8x8xf32>
    %135 = arith.extui %127 : vector<8x8xi1> to vector<8x8xi32>
    %136 = arith.sitofp %135 : vector<8x8xi32> to vector<8x8xf32>
    %137 = arith.mulf %132, %134 : vector<8x8xf32>
    %cst_45 = arith.constant dense<0.000000e+00> : vector<8xf32>
    %138 = vector.multi_reduction <add>, %137, %cst_45 [1] : vector<8x8xf32> to vector<8xf32>
    %139 = vector.shape_cast %138 : vector<8xf32> to vector<8x1xf32>
    %140 = arith.mulf %132, %136 : vector<8x8xf32>
    %cst_46 = arith.constant dense<0.000000e+00> : vector<8xf32>
    %141 = vector.multi_reduction <add>, %140, %cst_46 [1] : vector<8x8xf32> to vector<8xf32>
    %142 = vector.shape_cast %141 : vector<8xf32> to vector<8x1xf32>
    %cst_47 = arith.constant dense<0.000000e+00> : vector<8xf32>
    %143 = vector.multi_reduction <add>, %134, %cst_47 [1] : vector<8x8xf32> to vector<8xf32>
    %144 = vector.shape_cast %143 : vector<8xf32> to vector<8x1xf32>
    %cst_48 = arith.constant 3.000000e+38 : f32
    %145 = vector.broadcast %cst_48 : f32 to vector<8x8xf32>
    %146 = arith.select %10, %4, %145 : vector<8x8xi1>, vector<8x8xf32>
    %cst_49 = arith.constant dense<0x7F800000> : vector<8xf32>
    %147 = vector.multi_reduction <minimumf>, %146, %cst_49 [1] : vector<8x8xf32> to vector<8xf32>
    %148 = vector.shape_cast %147 : vector<8xf32> to vector<8x1xf32>
    %149 = arith.subf %16, %148 : vector<8x1xf32>
    %cst_50 = arith.constant 1.600000e+01 : f32
    %150 = vector.broadcast %cst_50 : f32 to vector<8x1xf32>
    %151 = arith.mulf %150, %149 : vector<8x1xf32>
    %152 = math.exp %151 : vector<8x1xf32>
    %cst_51 = arith.constant 5.000000e-01 : f32
    %153 = vector.broadcast %cst_51 : f32 to vector<8x1xf32>
    %154 = arith.cmpf olt, %144, %153 : vector<8x1xf32>
    %155 = arith.select %154, %152, %139 : vector<8x1xi1>, vector<8x1xf32>
    %156 = arith.addf %155, %142 : vector<8x1xf32>
    %157 = arith.divf %155, %156 : vector<8x1xf32>
    %158 = math.log %157 : vector<8x1xf32>
    %cst_52 = arith.constant 0.000000e+00 : f32
    %159 = vector.broadcast %cst_52 : f32 to vector<8x1xf32>
    %160 = arith.subf %159, %158 : vector<8x1xf32>
    %161 = arith.extui %10 : vector<8x8xi1> to vector<8x8xi32>
    %162 = arith.sitofp %161 : vector<8x8xi32> to vector<8x8xf32>
    %163 = arith.extui %11 : vector<8x8xi1> to vector<8x8xi32>
    %164 = arith.sitofp %163 : vector<8x8xi32> to vector<8x8xf32>
    %cst_53 = arith.constant dense<0.000000e+00> : vector<8xf32>
    %165 = vector.multi_reduction <add>, %162, %cst_53 [1] : vector<8x8xf32> to vector<8xf32>
    %166 = vector.shape_cast %165 : vector<8xf32> to vector<8x1xf32>
    %cst_54 = arith.constant dense<0.000000e+00> : vector<8xf32>
    %167 = vector.multi_reduction <add>, %164, %cst_54 [1] : vector<8x8xf32> to vector<8xf32>
    %168 = vector.shape_cast %167 : vector<8xf32> to vector<8x1xf32>
    %169 = arith.mulf %4, %162 : vector<8x8xf32>
    %cst_55 = arith.constant dense<0.000000e+00> : vector<8xf32>
    %170 = vector.multi_reduction <add>, %169, %cst_55 [1] : vector<8x8xf32> to vector<8xf32>
    %171 = vector.shape_cast %170 : vector<8xf32> to vector<8x1xf32>
    %172 = arith.divf %171, %166 : vector<8x1xf32>
    %173 = arith.mulf %4, %164 : vector<8x8xf32>
    %cst_56 = arith.constant dense<0.000000e+00> : vector<8xf32>
    %174 = vector.multi_reduction <add>, %173, %cst_56 [1] : vector<8x8xf32> to vector<8xf32>
    %175 = vector.shape_cast %174 : vector<8xf32> to vector<8x1xf32>
    %176 = arith.divf %175, %168 : vector<8x1xf32>
    %177 = tpu.iota {dimensions = array<i32: 1>} : vector<8x128xi32>
    %c0_i32_57 = arith.constant 0 : i32
    %178 = vector.broadcast %c0_i32_57 : i32 to vector<8x128xi32>
    %179 = arith.cmpi eq, %177, %178 : vector<8x128xi32>
    %cst_58 = arith.constant 0.000000e+00 : f32
    %180 = vector.shape_cast %160 : vector<8x1xf32> to vector<8x1xf32>
    %181 = vector.broadcast %180 : vector<8x1xf32> to vector<8x128xf32>
    %182 = vector.broadcast %cst_58 : f32 to vector<8x128xf32>
    %183 = arith.select %179, %181, %182 : vector<8x128xi1>, vector<8x128xf32>
    %c1_i32_59 = arith.constant 1 : i32
    %184 = vector.broadcast %c1_i32_59 : i32 to vector<8x128xi32>
    %185 = arith.cmpi eq, %177, %184 : vector<8x128xi32>
    %cst_60 = arith.constant 0.000000e+00 : f32
    %186 = vector.shape_cast %172 : vector<8x1xf32> to vector<8x1xf32>
    %187 = vector.broadcast %186 : vector<8x1xf32> to vector<8x128xf32>
    %188 = vector.broadcast %cst_60 : f32 to vector<8x128xf32>
    %189 = arith.select %185, %187, %188 : vector<8x128xi1>, vector<8x128xf32>
    %190 = arith.addf %183, %189 : vector<8x128xf32>
    %c2_i32_61 = arith.constant 2 : i32
    %191 = vector.broadcast %c2_i32_61 : i32 to vector<8x128xi32>
    %192 = arith.cmpi eq, %177, %191 : vector<8x128xi32>
    %cst_62 = arith.constant 0.000000e+00 : f32
    %193 = vector.shape_cast %176 : vector<8x1xf32> to vector<8x1xf32>
    %194 = vector.broadcast %193 : vector<8x1xf32> to vector<8x128xf32>
    %195 = vector.broadcast %cst_62 : f32 to vector<8x128xf32>
    %196 = arith.select %192, %194, %195 : vector<8x128xi1>, vector<8x128xf32>
    %197 = arith.addf %190, %196 : vector<8x128xf32>
    %c0_63 = arith.constant 0 : index
    %c0_64 = arith.constant 0 : index
    %198 = vector.load %arg5[%c0_63, %c0_64] : memref<8x128xf32, #tpu.memory_space<vmem>>, vector<8x128xf32>
    tpu.vector_store %arg5[%c0_63, %c0_64], %197 {strides = array<i32>} : memref<8x128xf32, #tpu.memory_space<vmem>>, vector<8x128xf32>,
    return
  }
  func.func @transform_0(%arg0: i32) -> (i32, i32) {
    %c0_i32 = arith.constant 0 : i32
    %c0_i32_0 = arith.constant 0 : i32
    return %arg0, %c0_i32 : i32, i32
  }
  func.func @transform_1(%arg0: i32) -> (i32, i32) {
    %c0_i32 = arith.constant 0 : i32
    %c0_i32_0 = arith.constant 0 : i32
    %c0_i32_1 = arith.constant 0 : i32
    return %c0_i32, %c0_i32_0 : i32, i32
  }
  func.func @transform_2(%arg0: i32) -> (i32, i32) {
    %c0_i32 = arith.constant 0 : i32
    %c0_i32_0 = arith.constant 0 : i32
    return %arg0, %c0_i32 : i32, i32
  }
  func.func @transform_3(%arg0: i32) -> (i32, i32) {
    %c0_i32 = arith.constant 0 : i32
    %c0_i32_0 = arith.constant 0 : i32
    %c0_i32_1 = arith.constant 0 : i32
    return %c0_i32, %c0_i32_0 : i32, i32
  }
  func.func @transform_4(%arg0: i32) -> (i32, i32) {
    %c0_i32 = arith.constant 0 : i32
    %c0_i32_0 = arith.constant 0 : i32
    return %arg0, %c0_i32 : i32, i32
  }
}

</mosaic_0001>

<llo_original>
// kernel: tpu_custom_call.1
$region0: #{tpu_custom_call.1}
  #allocation0 [shape = 'u32[]', space=smem, size = 0x4, offset = 0x4, fixed_abs, tag = 'smem constant byte address 0x4 - core index']
  #allocation1 [shape = 'u32[144,128]{1,0:T(1,128)}', space=vmem, size = 0x12000, scoped, tag = 'internal scratch']
  %s0 = inlined_call_operand.vmem [shape: f32[8,32], index: 0, kind: input, shape index: {}]
  %s1 = inlined_call_operand.hbm [shape: f32[8,32], index: 1, kind: input, shape index: {}]
  %s2 = inlined_call_operand.vmem [shape: s32[8,1], index: 2, kind: input, shape index: {}]
  %s3 = inlined_call_operand.vmem [shape: s32[1,8], index: 3, kind: input, shape index: {}]
  %s4 = inlined_call_operand.hbm [shape: f32[8,128], index: 4, kind: output, shape index: {}]
  %s5 = sld [smem:[#allocation0]]
  $region30: #{tpu_custom_call.1} parent=0
    _
  %s7 = ssub.s32 1, %s5
  %s8 = scalar_select 0, %s7, %s5
  $region1: #{tpu_custom_call.1} parent=0
    #allocation2 [shape = 'u8[4096]{0}', space=vmem, size = 0x1000, scoped, tag = 'input window, operand 1, single buffered']
    #allocation3 [shape = 's32[1]{0}', space=sflag, size = 0x4, scoped, tag = 'scoped memory for tpu_custom_call.1']
    #allocation4 [shape = 's32[1]{0}', space=sflag, size = 0x4, scoped, tag = 'scoped memory for tpu_custom_call.1']
    #allocation5 [shape = 'u8[4096]{0}', space=vmem, size = 0x1000, scoped, tag = 'output window, operand 0, single buffered']
    %9 = vsyncpa [#allocation3], 0
    %10 = vsyncpa [#allocation4], 0
    // Predicated region
    $region2: #{tpu_custom_call.1} parent=1 // pred_check
      _
    $region3: #{tpu_custom_call.1} parent=1 // pred_check_branch
      %12 = sbr.rel (0) target = $region5
    $region4: #{tpu_custom_call.1} parent=1 // pred_region
      _
    $region5: #{tpu_custom_call.1} parent=1 // pred_fallthru
      _
    // Predicated region
    $region6: #{tpu_custom_call.1} parent=1 // pred_check
      _
    $region7: #{tpu_custom_call.1} parent=1 // pred_check_branch
      %14 = sbr.rel (0) target = $region9
    $region8: #{tpu_custom_call.1} parent=1 // pred_region
      %s16 = ssub.s32 128, 128
      %17 = vsyncadd [#allocation3], %s16
      %s19 = sshll.u32 [#allocation2], 4
      %s20 = int_to_ptr.vmem [resolvable:$true] %s19
      %22 = dma.hbm_to_vmem [thread:$0]  %s1, 128, %s20, [#allocation3]
    $region9: #{tpu_custom_call.1} parent=1 // pred_fallthru
      _
    // Predicated region
    $region10: #{tpu_custom_call.1} parent=1 // pred_check
      _
    $region11: #{tpu_custom_call.1} parent=1 // pred_check_branch
      %24 = sbr.rel (0) target = $region13
    $region12: #{tpu_custom_call.1} parent=1 // pred_region
      _
    $region13: #{tpu_custom_call.1} parent=1 // pred_fallthru
      _
    // Predicated region
    $region14: #{tpu_custom_call.1} parent=1 // pred_check
      _
    $region15: #{tpu_custom_call.1} parent=1 // pred_check_branch
      %26 = sbr.rel (0) target = $region17
    $region16: #{tpu_custom_call.1} parent=1 // pred_region
      _
    $region17: #{tpu_custom_call.1} parent=1 // pred_fallthru
      _
    // Predicated region
    $region18: #{tpu_custom_call.1} parent=1 // pred_check
      _
    $region19: #{tpu_custom_call.1} parent=1 // pred_check_branch
      %28 = sbr.rel (0) target = $region21
    $region20: #{tpu_custom_call.1} parent=1 // pred_region
      %29 = dma.done [#allocation3], 128
    $region21: #{tpu_custom_call.1} parent=1 // pred_fallthru
      _
    %v30 = vld [vmem:[%s0] sm:$0xff]
    %v31 = vld [vmem:[#allocation2] sm:$0xff]
    %v32 = vld [vmem:[%s2] sm:$0xff]
    %v33 = vld [vmem:[%s3] sm:$0x1]
    %vm34 = vcmask 261120
    %v36 = vsel %vm34, %v30, 0
    %v39 = vsel %vm34, %v31, 0
    %41 = vmatprep.subr.mxu0 0.0
    %42 = vmatpush1.xpose.msra.mxu0 %v39
    %43 = vmatprep.subr.mxu0 0.0
    %44 = vmatpush1.xpose.msra.mxu0 0.0
    %45 = vmatprep.subr.mxu0 0.0
    %46 = vmatpush1.xpose.msra.mxu0 0.0
    %47 = vmatprep.subr.mxu0 0.0
    %48 = vmatpush1.xpose.msra.mxu0 0.0
    %49 = vmatprep.subr.mxu0 0.0
    %50 = vmatpush1.xpose.msra.mxu0 0.0
    %51 = vmatprep.subr.mxu0 0.0
    %52 = vmatpush1.xpose.msra.mxu0 0.0
    %53 = vmatprep.subr.mxu0 0.0
    %54 = vmatpush1.xpose.msra.mxu0 0.0
    %55 = vmatprep.subr.mxu0 0.0
    %56 = vmatpush1.xpose.msra.mxu0 0.0
    %57 = vmatprep.subr.mxu0 0.0
    %58 = vmatpush1.xpose.msra.mxu0 0.0
    %59 = vmatprep.subr.mxu0 0.0
    %60 = vmatpush1.xpose.msra.mxu0 0.0
    %61 = vmatprep.subr.mxu0 0.0
    %62 = vmatpush1.xpose.msra.mxu0 0.0
    %63 = vmatprep.subr.mxu0 0.0
    %64 = vmatpush1.xpose.msra.mxu0 0.0
    %65 = vmatprep.subr.mxu0 0.0
    %66 = vmatpush1.xpose.msra.mxu0 0.0
    %67 = vmatprep.subr.mxu0 0.0
    %68 = vmatpush1.xpose.msra.mxu0 0.0
    %69 = vmatprep.subr.mxu0 0.0
    %70 = vmatpush1.xpose.msra.mxu0 0.0
    %71 = vmatprep.subr.mxu0 0.0
    %72 = vmatpush1.xpose.msra.mxu0 0.0
    %73 = vmatprep.subr.mxu0 0.0
    %74 = vmatpush1.xpose.msra.mxu0 0.0
    %75 = vmatprep.subr.mxu0 0.0
    %76 = vmatpush1.xpose.msra.mxu0 0.0
    %77 = vmatprep.subr.mxu0 0.0
    %78 = vmatpush1.xpose.msra.mxu0 0.0
    %79 = vmatprep.subr.mxu0 0.0
    %80 = vmatpush1.xpose.msra.mxu0 0.0
    %81 = vmatprep.subr.mxu0 0.0
    %82 = vmatpush1.xpose.msra.mxu0 0.0
    %83 = vmatprep.subr.mxu0 0.0
    %84 = vmatpush1.xpose.msra.mxu0 0.0
    %85 = vmatprep.subr.mxu0 0.0
    %86 = vmatpush1.xpose.msra.mxu0 0.0
    %87 = vmatprep.subr.mxu0 0.0
    %88 = vmatpush1.xpose.msra.mxu0 0.0
    %89 = vmatprep.subr.mxu0 0.0
    %90 = vmatpush1.xpose.msra.mxu0 0.0
    %91 = vmatprep.subr.mxu0 0.0
    %92 = vmatpush1.xpose.msra.mxu0 0.0
    %93 = vmatprep.subr.mxu0 0.0
    %94 = vmatpush1.xpose.msra.mxu0 0.0
    %95 = vmatprep.subr.mxu0 0.0
    %96 = vmatpush1.xpose.msra.mxu0 0.0
    %97 = vmatprep.subr.mxu0 0.0
    %98 = vmatpush1.xpose.msra.mxu0 0.0
    %99 = vmatprep.subr.mxu0 0.0
    %100 = vmatpush1.xpose.msra.mxu0 0.0
    %101 = vmatprep.subr.mxu0 0.0
    %102 = vmatpush1.xpose.msra.mxu0 0.0
    %103 = vmatprep.subr.mxu0 0.0
    %104 = vmatpush1.xpose.msra.mxu0 0.0
    %105 = vmatprep.mubr.f32.mxu0 0.0
    %106 = vmatmul.mubr.f32.gmra.mrb[0].mxu0 %v36
    %v107 = vpop.f32.mrb[0].mxu0
    %v108 = vadd.f32 0.0, %v107
    %v109 = vpop.f32.mrb[0].mxu0
    %110 = vdwg.mxu0
    %111 = vset.pattern.permute.xlu0 0
    %112 = vperm.xlu0 %111, %v32
    %v113 = vpop.permute.xlu0 %112
    %v114 = vlaneseq
    %v115 = vshrl.u32 %v114, 7
    %v116 = vsub.s32 0, %v115
    %v117 = vrot.slane %v33, %v116
    %vm118 = vcmp.eq.s32.totalorder %v113, %v117
    %vm119 = vcmp.lt.f32.partialorder %v108, 1.0
    %vm120 = vmand %vm118, %vm119
    %vm121 = vmxor %vm118, 1
    %vm122 = vmor %vm120, %vm121
    %vm123 = vcmask 64512
    %v124 = vsel %vm123, %v108, 0.0
    %125 = vadd.xlane.f32.xlu0 %v124
    %v126 = vpop.xlane.xlu0 %125
    %v127 = vmul.f32 %v126, 0.125
    %v128 = vsel %vm122, %v108, 3e+38
    %v129 = vsel %vm123, %v128, inf
    %130 = vmin.xlane.f32.xlu0 %v129
    %v131 = vpop.xlane.xlu0 %130
    %vm132 = vcmp.eq.f32.partialorder %v128, %v131
    %v133 = vsel %vm132, 1, 0
    %v134 = vsel %vm123, %v133, 0
    %v135 = vand.u32 %v134, 65535
    %v136 = vshrl.u32 %v134, 16
    %v137 = vcvt.s32.f32 %v135
    %v138 = vcvt.s32.f32 %v136
    %139 = vadd.xlane.f32.xlu0 %v137
    %v140 = vpop.xlane.xlu0 %139
    %141 = vadd.xlane.f32.xlu0 %v138
    %v142 = vpop.xlane.xlu0 %141
    %v143 = vcvt.f32.s32 %v140
    %v144 = vcvt.f32.s32 %v142
    %v145 = vshll.u32 %v144, 16
    %v146 = vadd.s32 %v145, %v143
    %vm147 = vcmp.gt.s32.totalorder %v146, 4
    %vm148 = vcmp.lt.f32.partialorder %v131, 1e+38
    %vm149 = vmand %vm147, %vm148
    %v150 = vsel %vm149, %v131, -3e+38
    %v151 = vsel %vm132, 3e+38, %v128
    %v152 = vsel %vm123, %v151, inf
    %153 = vmin.xlane.f32.xlu0 %v152
    %v154 = vpop.xlane.xlu0 %153
    %vm155 = vcmp.eq.f32.partialorder %v151, %v154
    %v156 = vsel %vm155, 1, 0
    %v157 = vsel %vm123, %v156, 0
    %v158 = vand.u32 %v157, 65535
    %v159 = vshrl.u32 %v157, 16
    %v160 = vcvt.s32.f32 %v158
    %v161 = vcvt.s32.f32 %v159
    %162 = vadd.xlane.f32.xlu0 %v160
    %v163 = vpop.xlane.xlu0 %162
    %164 = vadd.xlane.f32.xlu0 %v161
    %v165 = vpop.xlane.xlu0 %164
    %v166 = vcvt.f32.s32 %v163
    %v167 = vcvt.f32.s32 %v165
    %v168 = vshll.u32 %v167, 16
    %v169 = vadd.s32 %v168, %v166
    %vm170 = vmxor %vm149, 1
    %v171 = vadd.s32 %v146, %v169
    %vm172 = vcmp.gt.s32.totalorder %v171, 4
    %vm173 = vcmp.lt.f32.partialorder %v154, 1e+38
    %vm174 = vmand %vm172, %vm173
    %vm175 = vmand %vm170, %vm174
    %v176 = vsel %vm175, %v154, %v150
    %vm177 = vmor %vm149, %vm175
    %v178 = vsel %vm155, 3e+38, %v151
    %v179 = vsel %vm123, %v178, inf
    %180 = vmin.xlane.f32.xlu0 %v179
    %v181 = vpop.xlane.xlu0 %180
    %vm182 = vcmp.eq.f32.partialorder %v178, %v181
    %v183 = vsel %vm182, 1, 0
    %v184 = vsel %vm123, %v183, 0
    %v185 = vand.u32 %v184, 65535
    %v186 = vshrl.u32 %v184, 16
    %v187 = vcvt.s32.f32 %v185
    %v188 = vcvt.s32.f32 %v186
    %189 = vadd.xlane.f32.xlu0 %v187
    %v190 = vpop.xlane.xlu0 %189
    %191 = vadd.xlane.f32.xlu0 %v188
    %v192 = vpop.xlane.xlu0 %191
    %v193 = vcvt.f32.s32 %v190
    %v194 = vcvt.f32.s32 %v192
    %v195 = vshll.u32 %v194, 16
    %v196 = vadd.s32 %v195, %v193
    %vm197 = vmxor %vm177, 1
    %v198 = vadd.s32 %v171, %v196
    %vm199 = vcmp.gt.s32.totalorder %v198, 4
    %vm200 = vcmp.lt.f32.partialorder %v181, 1e+38
    %vm201 = vmand %vm199, %vm200
    %vm202 = vmand %vm197, %vm201
    %v203 = vsel %vm202, %v181, %v176
    %vm204 = vmor %vm177, %vm202
    %v205 = vsel %vm182, 3e+38, %v178
    %v206 = vsel %vm123, %v205, inf
    %207 = vmin.xlane.f32.xlu0 %v206
    %v208 = vpop.xlane.xlu0 %207
    %vm209 = vcmp.eq.f32.partialorder %v205, %v208
    %v210 = vsel %vm209, 1, 0
    %v211 = vsel %vm123, %v210, 0
    %v212 = vand.u32 %v211, 65535
    %v213 = vshrl.u32 %v211, 16
    %v214 = vcvt.s32.f32 %v212
    %v215 = vcvt.s32.f32 %v213
    %216 = vadd.xlane.f32.xlu0 %v214
    %v217 = vpop.xlane.xlu0 %216
    %218 = vadd.xlane.f32.xlu0 %v215
    %v219 = vpop.xlane.xlu0 %218
    %v220 = vcvt.f32.s32 %v217
    %v221 = vcvt.f32.s32 %v219
    %v222 = vshll.u32 %v221, 16
    %v223 = vadd.s32 %v222, %v220
    %vm224 = vmxor %vm204, 1
    %v225 = vadd.s32 %v198, %v223
    %vm226 = vcmp.gt.s32.totalorder %v225, 4
    %vm227 = vcmp.lt.f32.partialorder %v208, 1e+38
    %vm228 = vmand %vm226, %vm227
    %vm229 = vmand %vm224, %vm228
    %v230 = vsel %vm229, %v208, %v203
    %vm231 = vmor %vm204, %vm229
    %v232 = vsel %vm209, 3e+38, %v205
    %v233 = vsel %vm123, %v232, inf
    %234 = vmin.xlane.f32.xlu0 %v233
    %v235 = vpop.xlane.xlu0 %234
    %vm236 = vcmp.eq.f32.partialorder %v232, %v235
    %v237 = vsel %vm236, 1, 0
    %v238 = vsel %vm123, %v237, 0
    %v239 = vand.u32 %v238, 65535
    %v240 = vshrl.u32 %v238, 16
    %v241 = vcvt.s32.f32 %v239
    %v242 = vcvt.s32.f32 %v240
    %243 = vadd.xlane.f32.xlu0 %v241
    %v244 = vpop.xlane.xlu0 %243
    %245 = vadd.xlane.f32.xlu0 %v242
    %v246 = vpop.xlane.xlu0 %245
    %v247 = vcvt.f32.s32 %v244
    %v248 = vcvt.f32.s32 %v246
    %v249 = vshll.u32 %v248, 16
    %v250 = vadd.s32 %v249, %v247
    %vm251 = vmxor %vm231, 1
    %v252 = vadd.s32 %v225, %v250
    %vm253 = vcmp.gt.s32.totalorder %v252, 4
    %vm254 = vcmp.lt.f32.partialorder %v235, 1e+38
    %vm255 = vmand %vm253, %vm254
    %vm256 = vmand %vm251, %vm255
    %v257 = vsel %vm256, %v235, %v230
    %vm258 = vcmp.lt.f32.partialorder %v108, %v257
    %vm259 = vmand %vm120, %vm258
    %vm260 = vmand %vm121, %vm258
    %v261 = vsub.f32 %v127, %v108
    %v262 = vmul.f32 %v261, 16.0
    %v263 = vmul.f32 %v262, 1.442695
    %v264 = vpow.pop %v263
    %v265 = vsel %vm259, 1, 0
    %v266 = vcvt.s32.f32 %v265
    %v267 = vsel %vm260, 1, 0
    %v268 = vcvt.s32.f32 %v267
    %v269 = vmul.f32 %v264, %v266
    %v270 = vsel %vm123, %v269, 0.0
    %271 = vadd.xlane.f32.xlu0 %v270
    %v272 = vpop.xlane.xlu0 %271
    %v273 = vmul.f32 %v264, %v268
    %v274 = vsel %vm123, %v273, 0.0
    %275 = vadd.xlane.f32.xlu0 %v274
    %v276 = vpop.xlane.xlu0 %275
    %v277 = vsel %vm123, %v266, 0.0
    %278 = vadd.xlane.f32.xlu0 %v277
    %v279 = vpop.xlane.xlu0 %278
    %v280 = vsel %vm120, %v108, 3e+38
    %v281 = vsel %vm123, %v280, inf
    %282 = vmin.xlane.f32.xlu0 %v281
    %v283 = vpop.xlane.xlu0 %282
    %v284 = vsub.f32 %v127, %v283
    %v285 = vmul.f32 %v284, 16.0
    %v286 = vmul.f32 %v285, 1.442695
    %v287 = vpow.pop %v286
    %vm288 = vcmp.lt.f32.partialorder %v279, 0.5
    %v289 = vsel %vm288, %v287, %v272
    %v290 = vadd.f32 %v289, %v276
    %v291 = vrcp.pop %v290
    %v292 = vmul.f32 %v289, %v291
    %v293 = vlog2.pop %v292
    %v294 = vmul.f32 %v293, 0.6931472
    %v295 = vsub.f32 0.0, %v294
    %v296 = vsel %vm120, 1, 0
    %v297 = vcvt.s32.f32 %v296
    %v298 = vsel %vm121, 1, 0
    %v299 = vcvt.s32.f32 %v298
    %v300 = vsel %vm123, %v297, 0.0
    %301 = vadd.xlane.f32.xlu0 %v300
    %v302 = vpop.xlane.xlu0 %301
    %v303 = vsel %vm123, %v299, 0.0
    %304 = vadd.xlane.f32.xlu0 %v303
    %v305 = vpop.xlane.xlu0 %304
    %v306 = vmul.f32 %v108, %v297
    %v307 = vsel %vm123, %v306, 0.0
    %308 = vadd.xlane.f32.xlu0 %v307
    %v309 = vpop.xlane.xlu0 %308
    %v310 = vrcp.pop %v302
    %v311 = vmul.f32 %v309, %v310
    %v312 = vmul.f32 %v108, %v299
    %v313 = vsel %vm123, %v312, 0.0
    %314 = vadd.xlane.f32.xlu0 %v313
    %v315 = vpop.xlane.xlu0 %314
    %v316 = vrcp.pop %v305
    %v317 = vmul.f32 %v315, %v316
    %v318 = vlaneseq
    %v319 = vand.u32 %v318, 127
    %vm320 = vcmp.eq.s32.totalorder %v319, 0
    %v321 = vsel %vm320, %v295, 0.0
    %vm322 = vcmp.eq.s32.totalorder %v319, 1
    %v323 = vsel %vm322, %v311, 0.0
    %v324 = vadd.f32 %v321, %v323
    %vm325 = vcmp.eq.s32.totalorder %v319, 2
    %v326 = vsel %vm325, %v317, 0.0
    %v327 = vadd.f32 %v324, %v326
    %328 = vst [vmem:[#allocation5] sm:$0xff] %v327
    // Predicated region
    $region22: #{tpu_custom_call.1} parent=1 // pred_check
      _
    $region23: #{tpu_custom_call.1} parent=1 // pred_check_branch
      %330 = sbr.rel (0) target = $region25
    $region24: #{tpu_custom_call.1} parent=1 // pred_region
      %s332 = ssub.s32 128, 128
      %333 = vsyncadd [#allocation4], %s332
      %s335 = sshll.u32 [#allocation5], 4
      %s336 = int_to_ptr.vmem [resolvable:$true] %s335
      %338 = dma.vmem_to_hbm [thread:$0]  %s336, 128, %s4, [#allocation4]
    $region25: #{tpu_custom_call.1} parent=1 // pred_fallthru
      _
    // Predicated region
    $region26: #{tpu_custom_call.1} parent=1 // pred_check
      _
    $region27: #{tpu_custom_call.1} parent=1 // pred_check_branch
      %340 = sbr.rel (0) target = $region29
    $region28: #{tpu_custom_call.1} parent=1 // pred_region
      %341 = dma.done [#allocation4], 128
    $region29: #{tpu_custom_call.1} parent=1 // pred_fallthru
      _
    %342 = vsyncpa [#allocation3], 1
    %343 = vsyncpa [#allocation4], 1

</llo_original>
